<compile_context>
chip_gen: v7x
topology: tpu7x:2x2x1
jax: 0.10.0
libtpu: 0.0.40
codegen_flags: <defaults>
</compile_context>

<pallas_src>
import math

import jax
import jax.numpy as jnp
from jax.experimental import pallas as pl
from jax.experimental.pallas import tpu as pltpu


def _round_up(v, m):
    return ((v + m - 1) // m) * m


def _make_label_kernel(s, sin_m, cos_m):
    s = float(s)
    sin_m = float(sin_m)
    cos_m = float(cos_m)

    def kernel(x_ref, w_ref, inv_x_ref, inv_w_ref, label_ref, cls_ref,
               o_ref, acc_ref):
        # program_id / num_programs only at the top level of the kernel body
        # (never inside pl.when) so the kernel also works under interpretation.
        k = pl.program_id(2)
        k_last = pl.num_programs(2) - 1

        @pl.when(k == 0)
        def _():
            acc_ref[...] = jnp.zeros_like(acc_ref)

        # x tile [TM, TK] contracted with w tile [TN, TK] on cin (no transpose).
        acc_ref[...] += jax.lax.dot_general(
            x_ref[...], w_ref[...],
            dimension_numbers=(((1,), (1,)), ((), ())),
            preferred_element_type=jnp.float32)

        @pl.when(k == k_last)
        def _():
            # cosine: accumulated logits times hoisted 1/|x| and 1/|w|.
            cos = acc_ref[...] * inv_x_ref[...] * inv_w_ref[...]     # [TM, TN]
            hit = label_ref[...] == cls_ref[...]                     # [TM,1]==[1,TN]
            sin = jnp.sqrt(jnp.maximum(1.0 - cos * cos, 0.0))        # NaN-safe
            margin = cos * cos_m - sin * sin_m
            o_ref[...] = jnp.where(hit, margin, cos) * s

    return kernel


def _nolabel_kernel(x_ref, w_ref, inv_x_ref, inv_w_ref, o_ref, acc_ref):
    k = pl.program_id(2)
    k_last = pl.num_programs(2) - 1

    @pl.when(k == 0)
    def _():
        acc_ref[...] = jnp.zeros_like(acc_ref)

    acc_ref[...] += jax.lax.dot_general(
        x_ref[...], w_ref[...],
        dimension_numbers=(((1,), (1,)), ((), ())),
        preferred_element_type=jnp.float32)

    @pl.when(k == k_last)
    def _():
        o_ref[...] = acc_ref[...] * inv_x_ref[...] * inv_w_ref[...]


def arcface_forward(x, weight, label=None, *, s=30.0, m=0.3):
    """ArcFace forward. x: [B, cin] f32, weight: [cout, cin] f32, label: [B] int or None."""
    B, cin = x.shape
    cout, cin_w = weight.shape
    assert cin == cin_w

    x = x.astype(jnp.float32)
    weight = weight.astype(jnp.float32)

    # Tile plan: lane-dense, (8,128)/MXU-aligned, sized well under the scoped
    # VMEM default on every generation (v5e 16 MiB / v6e 32 MiB / v7x 32 MiB).
    TM = min(_round_up(B, 8), 256)
    TN = min(_round_up(cout, 128), 512)
    TK = min(_round_up(cin, 128), 512)

    Bp = _round_up(B, TM)
    coutp = _round_up(cout, TN)
    cinp = _round_up(cin, TK)

    # Hoisted norm reciprocals: computed once (EUP rsqrt) instead of cross-lane
    # reductions + divides inside every grid step.
    x_sq = jnp.sum(x * x, axis=1, keepdims=True)                       # [B, 1]
    inv_x = jnp.where(x_sq > 0, jax.lax.rsqrt(x_sq), 0.0)
    w_sq = jnp.sum(weight * weight, axis=1, keepdims=True)             # [cout, 1]
    inv_w = jnp.where(w_sq > 0, jax.lax.rsqrt(w_sq), 0.0).reshape(1, cout)

    # Zero-pad to the tile grid (zeros don't perturb matmul or norms; padded
    # rows/cols are sliced off on return).
    x_p = jnp.pad(x, ((0, Bp - B), (0, cinp - cin)))
    w_p = jnp.pad(weight, ((0, coutp - cout), (0, cinp - cin)))
    inv_x_p = jnp.pad(inv_x, ((0, Bp - B), (0, 0)))
    inv_w_p = jnp.pad(inv_w, ((0, 0), (0, coutp - cout)))

    grid = (Bp // TM, coutp // TN, cinp // TK)

    x_spec = pl.BlockSpec((TM, TK), lambda i, j, k: (i, k))
    w_spec = pl.BlockSpec((TN, TK), lambda i, j, k: (j, k))
    inv_x_spec = pl.BlockSpec((TM, 1), lambda i, j, k: (i, 0))
    inv_w_spec = pl.BlockSpec((1, TN), lambda i, j, k: (0, j))
    out_spec = pl.BlockSpec((TM, TN), lambda i, j, k: (i, j))

    out_shape = jax.ShapeDtypeStruct((Bp, coutp), jnp.float32)
    scratch = [pltpu.VMEM((TM, TN), jnp.float32)]
    cparams = pltpu.CompilerParams(
        dimension_semantics=("parallel", "parallel", "arbitrary"))

    if label is not None:
        # Labels as a [B,1] column; padded rows use -1 (never matches a class).
        label2d = jnp.pad(label.astype(jnp.int32).reshape(B, 1),
                          ((0, Bp - B), (0, 0)), constant_values=-1)
        # Global class ids streamed as a (1, TN) tile instead of
        # program_id + iota inside the epilogue.  Padded classes get -2.
        cls_ids = jnp.pad(jnp.arange(cout, dtype=jnp.int32).reshape(1, cout),
                          ((0, 0), (0, coutp - cout)), constant_values=-2)
        lbl_spec = pl.BlockSpec((TM, 1), lambda i, j, k: (i, 0))
        cls_spec = pl.BlockSpec((1, TN), lambda i, j, k: (0, j))
        kernel = _make_label_kernel(s, math.sin(m), math.cos(m))
        out = pl.pallas_call(
            kernel,
            out_shape=out_shape,
            grid_spec=pltpu.PrefetchScalarGridSpec(
                num_scalar_prefetch=0,
                grid=grid,
                in_specs=[x_spec, w_spec, inv_x_spec, inv_w_spec,
                          lbl_spec, cls_spec],
                out_specs=out_spec,
                scratch_shapes=scratch),
            compiler_params=cparams,
        )(x_p, w_p, inv_x_p, inv_w_p, label2d, cls_ids)
    else:
        out = pl.pallas_call(
            _nolabel_kernel,
            out_shape=out_shape,
            grid_spec=pltpu.PrefetchScalarGridSpec(
                num_scalar_prefetch=0,
                grid=grid,
                in_specs=[x_spec, w_spec, inv_x_spec, inv_w_spec],
                out_specs=out_spec,
                scratch_shapes=scratch),
            compiler_params=cparams,
        )(x_p, w_p, inv_x_p, inv_w_p)

    return out[:B, :cout]


def _reference(x, weight, label, s, m):
    # Pure-JAX reference mirroring the PyTorch module.
    sin_m = math.sin(m)
    cos_m = math.cos(m)
    w_l2 = jnp.linalg.norm(weight, axis=1, keepdims=True).T      # [1, cout]
    x_l2 = jnp.linalg.norm(x, axis=1, keepdims=True)             # [B, 1]
    cos = (x @ weight.T) / (x_l2 * w_l2)
    if label is not None:
        one_hot = jax.nn.one_hot(label, weight.shape[0], dtype=cos.dtype)
        sin = (1.0 - cos ** 2) ** 0.5
        angle_sum = cos * cos_m - sin * sin_m
        cos = angle_sum * one_hot + cos * (1.0 - one_hot)
        cos = cos * s
    return cos


if __name__ == "__main__":
    key = jax.random.PRNGKey(0)
    kx, kw, kl = jax.random.split(key, 3)

    B, cin, cout = 8, 32, 16
    s, m = 30.0, 0.3

    x = jax.random.normal(kx, (B, cin), dtype=jnp.float32)
    # nn.Linear(cin, cout, bias=False) weight layout: [cout, cin]
    weight = jax.random.normal(kw, (cout, cin), dtype=jnp.float32) * 0.1
    label = jax.random.randint(kl, (B,), 0, cout, dtype=jnp.int32)

    # with label (margin + scale path)
    out = jax.block_until_ready(arcface_forward(x, weight, label, s=s, m=m))
    ref = _reference(x, weight, label, s, m)

    # without label (plain cosine logits)
    out_nl = jax.block_until_ready(arcface_forward(x, weight, None, s=s, m=m))
    ref_nl = _reference(x, weight, None, s, m)

    assert jnp.allclose(out, ref, atol=1e-4, rtol=1e-4), "mismatch (label path)"
    assert jnp.allclose(out_nl, ref_nl, atol=1e-4, rtol=1e-4), "mismatch (no-label path)"
    print("KERNEL_OK")
</pallas_src>

<mosaic_0001>
module attributes {stable_mosaic.version = 11 : i64} {
  func.func @kernel(%arg0: i32, %arg1: i32, %arg2: i32, %arg3: memref<8x128xf32, #tpu.memory_space<vmem>>, %arg4: memref<128x128xf32, #tpu.memory_space<vmem>>, %arg5: memref<8x1xf32, #tpu.memory_space<vmem>>, %arg6: memref<1x128xf32, #tpu.memory_space<vmem>>, %arg7: memref<8x1xi32, #tpu.memory_space<vmem>>, %arg8: memref<1x128xi32, #tpu.memory_space<vmem>>, %arg9: memref<8x128xf32, #tpu.memory_space<vmem>>, %arg10: memref<8x128xf32, #tpu.memory_space<vmem>>) attributes {dimension_semantics = [#tpu.dimension_semantics<parallel>, #tpu.dimension_semantics<parallel>, #tpu.dimension_semantics<arbitrary>], iteration_bounds = array<i64: 1, 1, 1>, scalar_prefetch = 0 : i64, scratch_operands = 1 : i64, tpu.core_type = #tpu.core_type<tc>, window_params = [{transform_indices = @transform_0, window_bounds = array<i64: 8, 128>}, {transform_indices = @transform_1, window_bounds = array<i64: 128, 128>}, {transform_indices = @transform_2, window_bounds = array<i64: 8, 1>}, {transform_indices = @transform_3, window_bounds = array<i64: 1, 128>}, {transform_indices = @transform_4, window_bounds = array<i64: 8, 1>}, {transform_indices = @transform_5, window_bounds = array<i64: 1, 128>}, {transform_indices = @transform_6, window_bounds = array<i64: 8, 128>}]} {
    %c0_i32 = arith.constant 0 : i32
    %0 = arith.cmpi eq, %arg2, %c0_i32 : i32
    %1 = arith.extui %0 : i1 to i32
    %c0_i32_0 = arith.constant 0 : i32
    %2 = arith.cmpi ne, %1, %c0_i32_0 : i32
    scf.if %2 {
      %cst_10 = arith.constant 0.000000e+00 : f32
      %12 = vector.broadcast %cst_10 : f32 to vector<8x128xf32>
      %c0_11 = arith.constant 0 : index
      %c0_12 = arith.constant 0 : index
      %13 = vector.load %arg10[%c0_11, %c0_12] : memref<8x128xf32, #tpu.memory_space<vmem>>, vector<8x128xf32>
      tpu.vector_store %arg10[%c0_11, %c0_12], %12 {strides = array<i32>} : memref<8x128xf32, #tpu.memory_space<vmem>>, vector<8x128xf32>,
    } else {
    }
    %c0 = arith.constant 0 : index
    %c0_1 = arith.constant 0 : index
    %3 = vector.load %arg10[%c0, %c0_1] : memref<8x128xf32, #tpu.memory_space<vmem>>, vector<8x128xf32>
    %c0_2 = arith.constant 0 : index
    %c0_3 = arith.constant 0 : index
    %4 = vector.load %arg3[%c0_2, %c0_3] : memref<8x128xf32, #tpu.memory_space<vmem>>, vector<8x128xf32>
    %c0_4 = arith.constant 0 : index
    %c0_5 = arith.constant 0 : index
    %5 = vector.load %arg4[%c0_4, %c0_5] : memref<128x128xf32, #tpu.memory_space<vmem>>, vector<128x128xf32>
    %cst = arith.constant dense<0.000000e+00> : vector<8x128xf32>
    %6 = tpu.matmul %4, %5, %cst {dimension_numbers = #tpu.dot_dimension_numbers<[1], [1], [0], [0], [0, 0, 1, 0], [], []>} : vector<8x128xf32>, vector<128x128xf32>, vector<8x128xf32> -> vector<8x128xf32>
    %7 = arith.addf %3, %6 : vector<8x128xf32>
    %c0_6 = arith.constant 0 : index
    %c0_7 = arith.constant 0 : index
    %8 = vector.load %arg10[%c0_6, %c0_7] : memref<8x128xf32, #tpu.memory_space<vmem>>, vector<8x128xf32>
    tpu.vector_store %arg10[%c0_6, %c0_7], %7 {strides = array<i32>} : memref<8x128xf32, #tpu.memory_space<vmem>>, vector<8x128xf32>,
    %c0_i32_8 = arith.constant 0 : i32
    %9 = arith.cmpi eq, %arg2, %c0_i32_8 : i32
    %10 = arith.extui %9 : i1 to i32
    %c0_i32_9 = arith.constant 0 : i32
    %11 = arith.cmpi ne, %10, %c0_i32_9 : i32
    scf.if %11 {
      %c0_10 = arith.constant 0 : index
      %c0_11 = arith.constant 0 : index
      %12 = vector.load %arg10[%c0_10, %c0_11] : memref<8x128xf32, #tpu.memory_space<vmem>>, vector<8x128xf32>
      %c0_12 = arith.constant 0 : index
      %c0_13 = arith.constant 0 : index
      %13 = vector.load %arg5[%c0_12, %c0_13] : memref<8x1xf32, #tpu.memory_space<vmem>>, vector<8x1xf32>
      %14 = vector.broadcast %13 : vector<8x1xf32> to vector<8x128xf32>
      %15 = arith.mulf %12, %14 : vector<8x128xf32>
      %c0_14 = arith.constant 0 : index
      %c0_15 = arith.constant 0 : index
      %16 = vector.load %arg6[%c0_14, %c0_15] : memref<1x128xf32, #tpu.memory_space<vmem>>, vector<1x128xf32>
      %17 = vector.broadcast %16 : vector<1x128xf32> to vector<8x128xf32>
      %18 = arith.mulf %15, %17 : vector<8x128xf32>
      %c0_16 = arith.constant 0 : index
      %c0_17 = arith.constant 0 : index
      %19 = vector.load %arg7[%c0_16, %c0_17] : memref<8x1xi32, #tpu.memory_space<vmem>>, vector<8x1xi32>
      %c0_18 = arith.constant 0 : index
      %c0_19 = arith.constant 0 : index
      %20 = vector.load %arg8[%c0_18, %c0_19] : memref<1x128xi32, #tpu.memory_space<vmem>>, vector<1x128xi32>
      %21 = vector.broadcast %19 : vector<8x1xi32> to vector<8x128xi32>
      %22 = vector.broadcast %20 : vector<1x128xi32> to vector<8x128xi32>
      %23 = arith.cmpi eq, %21, %22 : vector<8x128xi32>
      %24 = arith.mulf %18, %18 : vector<8x128xf32>
      %cst_20 = arith.constant 1.000000e+00 : f32
      %25 = vector.broadcast %cst_20 : f32 to vector<8x128xf32>
      %26 = arith.subf %25, %24 : vector<8x128xf32>
      %cst_21 = arith.constant 0.000000e+00 : f32
      %27 = vector.broadcast %cst_21 : f32 to vector<8x128xf32>
      %28 = arith.maximumf %26, %27 : vector<8x128xf32>
      %29 = math.sqrt %28 : vector<8x128xf32>
      %cst_22 = arith.constant 0.955336511 : f32
      %30 = vector.broadcast %cst_22 : f32 to vector<8x128xf32>
      %31 = arith.mulf %18, %30 : vector<8x128xf32>
      %cst_23 = arith.constant 0.295520216 : f32
      %32 = vector.broadcast %cst_23 : f32 to vector<8x128xf32>
      %33 = arith.mulf %29, %32 : vector<8x128xf32>
      %34 = arith.subf %31, %33 : vector<8x128xf32>
      %35 = arith.select %23, %34, %18 : vector<8x128xi1>, vector<8x128xf32>
      %cst_24 = arith.constant 3.000000e+01 : f32
      %36 = vector.broadcast %cst_24 : f32 to vector<8x128xf32>
      %37 = arith.mulf %35, %36 : vector<8x128xf32>
      %c0_25 = arith.constant 0 : index
      %c0_26 = arith.constant 0 : index
      %38 = vector.load %arg9[%c0_25, %c0_26] : memref<8x128xf32, #tpu.memory_space<vmem>>, vector<8x128xf32>
      tpu.vector_store %arg9[%c0_25, %c0_26], %37 {strides = array<i32>} : memref<8x128xf32, #tpu.memory_space<vmem>>, vector<8x128xf32>,
    } else {
    }
    return
  }
  func.func @transform_0(%arg0: i32, %arg1: i32, %arg2: i32) -> (i32, i32) {
    %c0_i32 = arith.constant 0 : i32
    return %arg0, %arg2 : i32, i32
  }
  func.func @transform_1(%arg0: i32, %arg1: i32, %arg2: i32) -> (i32, i32) {
    %c0_i32 = arith.constant 0 : i32
    return %arg1, %arg2 : i32, i32
  }
  func.func @transform_2(%arg0: i32, %arg1: i32, %arg2: i32) -> (i32, i32) {
    %c0_i32 = arith.constant 0 : i32
    %c0_i32_0 = arith.constant 0 : i32
    return %arg0, %c0_i32 : i32, i32
  }
  func.func @transform_3(%arg0: i32, %arg1: i32, %arg2: i32) -> (i32, i32) {
    %c0_i32 = arith.constant 0 : i32
    %c0_i32_0 = arith.constant 0 : i32
    return %c0_i32, %arg1 : i32, i32
  }
  func.func @transform_4(%arg0: i32, %arg1: i32, %arg2: i32) -> (i32, i32) {
    %c0_i32 = arith.constant 0 : i32
    %c0_i32_0 = arith.constant 0 : i32
    return %arg0, %c0_i32 : i32, i32
  }
  func.func @transform_5(%arg0: i32, %arg1: i32, %arg2: i32) -> (i32, i32) {
    %c0_i32 = arith.constant 0 : i32
    %c0_i32_0 = arith.constant 0 : i32
    return %c0_i32, %arg1 : i32, i32
  }
  func.func @transform_6(%arg0: i32, %arg1: i32, %arg2: i32) -> (i32, i32) {
    %c0_i32 = arith.constant 0 : i32
    return %arg0, %arg1 : i32, i32
  }
}

</mosaic_0001>

<llo_original>
// kernel: tpu_custom_call.1
$region0: #{tpu_custom_call.1}
  #allocation0 [shape = 'u32[]', space=smem, size = 0x4, offset = 0x4, fixed_abs, tag = 'smem constant byte address 0x4 - core index']
  #allocation1 [shape = 'u32[144,128]{1,0:T(1,128)}', space=vmem, size = 0x12000, scoped, tag = 'internal scratch']
  #allocation2 [shape = 'f32[8,128]{1,0:T(8,128)}', space=vmem, size = 0x1000, scoped, tag = 'scratch operand']
  %s0 = inlined_call_operand.vmem [shape: f32[8,128], index: 0, kind: input, shape index: {}]
  %s1 = inlined_call_operand.hbm [shape: f32[128,128], index: 1, kind: input, shape index: {}]
  %s2 = inlined_call_operand.vmem [shape: f32[8,1], index: 2, kind: input, shape index: {}]
  %s3 = inlined_call_operand.vmem [shape: f32[1,128], index: 3, kind: input, shape index: {}]
  %s4 = inlined_call_operand.vmem [shape: s32[8,1], index: 4, kind: input, shape index: {}]
  %s5 = inlined_call_operand.vmem [shape: s32[1,128], index: 5, kind: input, shape index: {}]
  %s6 = inlined_call_operand.hbm [shape: f32[8,128], index: 6, kind: output, shape index: {}]
  %s7 = sld [smem:[#allocation0]]
  $region46: #{tpu_custom_call.1} parent=0
    _
  %s9 = ssub.s32 1, %s7
  %s10 = scalar_select 0, %s9, %s7
  $region1: #{tpu_custom_call.1} parent=0
    #allocation3 [shape = 'u8[65536]{0}', space=vmem, size = 0x10000, scoped, tag = 'input window, operand 1, single buffered']
    #allocation4 [shape = 's32[1]{0}', space=sflag, size = 0x4, scoped, tag = 'scoped memory for tpu_custom_call.1']
    #allocation5 [shape = 's32[1]{0}', space=sflag, size = 0x4, scoped, tag = 'scoped memory for tpu_custom_call.1']
    #allocation6 [shape = 'u8[4096]{0}', space=vmem, size = 0x1000, scoped, tag = 'output window, operand 0, single buffered']
    %11 = vsyncpa [#allocation4], 0
    %12 = vsyncpa [#allocation5], 0
    // Predicated region
    $region2: #{tpu_custom_call.1} parent=1 // pred_check
      _
    $region3: #{tpu_custom_call.1} parent=1 // pred_check_branch
      %14 = sbr.rel (0) target = $region5
    $region4: #{tpu_custom_call.1} parent=1 // pred_region
      _
    $region5: #{tpu_custom_call.1} parent=1 // pred_fallthru
      _
    // Predicated region
    $region6: #{tpu_custom_call.1} parent=1 // pred_check
      _
    $region7: #{tpu_custom_call.1} parent=1 // pred_check_branch
      %16 = sbr.rel (0) target = $region9
    $region8: #{tpu_custom_call.1} parent=1 // pred_region
      %s18 = ssub.s32 2048, 2048
      %19 = vsyncadd [#allocation4], %s18
      %s20 = sshll.u32 [#allocation3], 4
      %s21 = int_to_ptr.vmem [resolvable:$true] %s20
      %26 = dma.hbm_to_vmem [thread:$0]  %s1, 2048, %s21, [#allocation4], 128, 128, 8
    $region9: #{tpu_custom_call.1} parent=1 // pred_fallthru
      _
    // Predicated region
    $region10: #{tpu_custom_call.1} parent=1 // pred_check
      _
    $region11: #{tpu_custom_call.1} parent=1 // pred_check_branch
      %28 = sbr.rel (0) target = $region13
    $region12: #{tpu_custom_call.1} parent=1 // pred_region
      _
    $region13: #{tpu_custom_call.1} parent=1 // pred_fallthru
      _
    // Predicated region
    $region14: #{tpu_custom_call.1} parent=1 // pred_check
      _
    $region15: #{tpu_custom_call.1} parent=1 // pred_check_branch
      %30 = sbr.rel (0) target = $region17
    $region16: #{tpu_custom_call.1} parent=1 // pred_region
      _
    $region17: #{tpu_custom_call.1} parent=1 // pred_fallthru
      _
    // Predicated region
    $region18: #{tpu_custom_call.1} parent=1 // pred_check
      _
    $region19: #{tpu_custom_call.1} parent=1 // pred_check_branch
      %32 = sbr.rel (0) target = $region21
    $region20: #{tpu_custom_call.1} parent=1 // pred_region
      _
    $region21: #{tpu_custom_call.1} parent=1 // pred_fallthru
      _
    // Predicated region
    $region22: #{tpu_custom_call.1} parent=1 // pred_check
      _
    $region23: #{tpu_custom_call.1} parent=1 // pred_check_branch
      %34 = sbr.rel (0) target = $region25
    $region24: #{tpu_custom_call.1} parent=1 // pred_region
      _
    $region25: #{tpu_custom_call.1} parent=1 // pred_fallthru
      _
    // Predicated region
    $region26: #{tpu_custom_call.1} parent=1 // pred_check
      _
    $region27: #{tpu_custom_call.1} parent=1 // pred_check_branch
      %36 = sbr.rel (0) target = $region29
    $region28: #{tpu_custom_call.1} parent=1 // pred_region
      %37 = dma.done [#allocation4], 2048
    $region29: #{tpu_custom_call.1} parent=1 // pred_fallthru
      _
    %p38 = scmp.eq.s32.totalorder 0, 0
    // Predicated region
    $region30: #{tpu_custom_call.1} parent=1 // pred_check
      %p39 = pneg %p38
    $region31: #{tpu_custom_call.1} parent=1 // pred_check_branch
      %41 = sbr.rel (%p39) target = $region33
    $region32: #{tpu_custom_call.1} parent=1 // pred_region
      %42 = vst [vmem:[#allocation2] sm:$0xff] 0.0
    $region33: #{tpu_custom_call.1} parent=1 // pred_fallthru
      _
    %v43 = vld [vmem:[#allocation2] sm:$0xff]
    %v44 = vld [vmem:[%s0] sm:$0xff]
    %v45 = vld [vmem:[#allocation3] sm:$0xff]
    %v46 = vld [vmem:[#allocation3 + $0x8] sm:$0xff]
    %v47 = vld [vmem:[#allocation3 + $0x10] sm:$0xff]
    %v48 = vld [vmem:[#allocation3 + $0x18] sm:$0xff]
    %v49 = vld [vmem:[#allocation3 + $0x20] sm:$0xff]
    %v50 = vld [vmem:[#allocation3 + $0x28] sm:$0xff]
    %v51 = vld [vmem:[#allocation3 + $0x30] sm:$0xff]
    %v52 = vld [vmem:[#allocation3 + $0x38] sm:$0xff]
    %v53 = vld [vmem:[#allocation3 + $0x40] sm:$0xff]
    %v54 = vld [vmem:[#allocation3 + $0x48] sm:$0xff]
    %v55 = vld [vmem:[#allocation3 + $0x50] sm:$0xff]
    %v56 = vld [vmem:[#allocation3 + $0x58] sm:$0xff]
    %v57 = vld [vmem:[#allocation3 + $0x60] sm:$0xff]
    %v58 = vld [vmem:[#allocation3 + $0x68] sm:$0xff]
    %v59 = vld [vmem:[#allocation3 + $0x70] sm:$0xff]
    %v60 = vld [vmem:[#allocation3 + $0x78] sm:$0xff]
    %61 = vmatprep.subr.mxu0 0.0
    %62 = vmatpush1.xpose.msra.mxu0 %v45
    %63 = vmatprep.subr.mxu0 0.0
    %64 = vmatpush1.xpose.msra.mxu0 %v46
    %65 = vmatprep.subr.mxu0 0.0
    %66 = vmatpush1.xpose.msra.mxu0 %v47
    %67 = vmatprep.subr.mxu0 0.0
    %68 = vmatpush1.xpose.msra.mxu0 %v48
    %69 = vmatprep.subr.mxu0 0.0
    %70 = vmatpush1.xpose.msra.mxu0 %v49
    %71 = vmatprep.subr.mxu0 0.0
    %72 = vmatpush1.xpose.msra.mxu0 %v50
    %73 = vmatprep.subr.mxu0 0.0
    %74 = vmatpush1.xpose.msra.mxu0 %v51
    %75 = vmatprep.subr.mxu0 0.0
    %76 = vmatpush1.xpose.msra.mxu0 %v52
    %77 = vmatprep.subr.mxu0 0.0
    %78 = vmatpush1.xpose.msra.mxu0 %v53
    %79 = vmatprep.subr.mxu0 0.0
    %80 = vmatpush1.xpose.msra.mxu0 %v54
    %81 = vmatprep.subr.mxu0 0.0
    %82 = vmatpush1.xpose.msra.mxu0 %v55
    %83 = vmatprep.subr.mxu0 0.0
    %84 = vmatpush1.xpose.msra.mxu0 %v56
    %85 = vmatprep.subr.mxu0 0.0
    %86 = vmatpush1.xpose.msra.mxu0 %v57
    %87 = vmatprep.subr.mxu0 0.0
    %88 = vmatpush1.xpose.msra.mxu0 %v58
    %89 = vmatprep.subr.mxu0 0.0
    %90 = vmatpush1.xpose.msra.mxu0 %v59
    %91 = vmatprep.subr.mxu0 0.0
    %92 = vmatpush1.xpose.msra.mxu0 %v60
    %93 = vmatprep.subr.mxu0 0.0
    %94 = vmatpush1.xpose.msra.mxu0 0.0
    %95 = vmatprep.subr.mxu0 0.0
    %96 = vmatpush1.xpose.msra.mxu0 0.0
    %97 = vmatprep.subr.mxu0 0.0
    %98 = vmatpush1.xpose.msra.mxu0 0.0
    %99 = vmatprep.subr.mxu0 0.0
    %100 = vmatpush1.xpose.msra.mxu0 0.0
    %101 = vmatprep.subr.mxu0 0.0
    %102 = vmatpush1.xpose.msra.mxu0 0.0
    %103 = vmatprep.subr.mxu0 0.0
    %104 = vmatpush1.xpose.msra.mxu0 0.0
    %105 = vmatprep.subr.mxu0 0.0
    %106 = vmatpush1.xpose.msra.mxu0 0.0
    %107 = vmatprep.subr.mxu0 0.0
    %108 = vmatpush1.xpose.msra.mxu0 0.0
    %109 = vmatprep.subr.mxu0 0.0
    %110 = vmatpush1.xpose.msra.mxu0 0.0
    %111 = vmatprep.subr.mxu0 0.0
    %112 = vmatpush1.xpose.msra.mxu0 0.0
    %113 = vmatprep.subr.mxu0 0.0
    %114 = vmatpush1.xpose.msra.mxu0 0.0
    %115 = vmatprep.subr.mxu0 0.0
    %116 = vmatpush1.xpose.msra.mxu0 0.0
    %117 = vmatprep.subr.mxu0 0.0
    %118 = vmatpush1.xpose.msra.mxu0 0.0
    %119 = vmatprep.subr.mxu0 0.0
    %120 = vmatpush1.xpose.msra.mxu0 0.0
    %121 = vmatprep.subr.mxu0 0.0
    %122 = vmatpush1.xpose.msra.mxu0 0.0
    %123 = vmatprep.subr.mxu0 0.0
    %124 = vmatpush1.xpose.msra.mxu0 0.0
    %125 = vmatprep.mubr.f32.mxu0 0.0
    %126 = vmatmul.mubr.f32.gmra.mrb[0].mxu0 %v44
    %v127 = vpop.f32.mrb[0].mxu0
    %v128 = vadd.f32 0.0, %v127
    %v129 = vpop.f32.mrb[0].mxu0
    %130 = vdwg.mxu0
    %v131 = vadd.f32 %v43, %v128
    %132 = vst [vmem:[#allocation2] sm:$0xff] %v131
    // Predicated region
    $region34: #{tpu_custom_call.1} parent=1 // pred_check
      %p133 = pneg %p38
    $region35: #{tpu_custom_call.1} parent=1 // pred_check_branch
      %135 = sbr.rel (%p133) target = $region37
    $region36: #{tpu_custom_call.1} parent=1 // pred_region
      %v136 = vld [vmem:[#allocation2] sm:$0xff]
      %v137 = vld [vmem:[%s2] sm:$0xff]
      %139 = vset.pattern.permute.xlu0 0
      %140 = vperm.xlu0 %139, %v137
      %v141 = vpop.permute.xlu0 %140
      %v143 = vmul.f32 %v136, %v141
      %v144 = vld [vmem:[%s3] sm:$0x1]
      %v146 = vlaneseq
      %v147 = vshrl.u32 %v146, 7
      %v148 = vsub.s32 0, %v147
      %v149 = vrot.slane %v144, %v148
      %v151 = vmul.f32 %v143, %v149
      %v152 = vld [vmem:[%s4] sm:$0xff]
      %v153 = vld [vmem:[%s5] sm:$0x1]
      %154 = vset.pattern.permute.xlu0 0
      %155 = vperm.xlu0 %154, %v152
      %v156 = vpop.permute.xlu0 %155
      %v157 = vlaneseq
      %v158 = vshrl.u32 %v157, 7
      %v159 = vsub.s32 0, %v158
      %v160 = vrot.slane %v153, %v159
      %vm161 = vcmp.eq.s32.totalorder %v156, %v160
      %v162 = vmul.f32 %v151, %v151
      %v163 = vsub.f32 1.0, %v162
      %v164 = vmax.f32 %v163, 0.0
      %v165 = vrsqrt.pop %v164
      %v166 = vmul.f32 %v164, %v165
      %vm167 = vcmp.eq.f32.partialorder %v164, inf
      %v168 = vsel %vm167, %v164, %v166
      %vm169 = vcmp.eq.f32.partialorder %v164, 0.0
      %v170 = vand.u32 %v164, 2147483648
      %v171 = vsel %vm169, %v170, %v168
      %v172 = vmul.f32 %v151, 0.9553365
      %v173 = vmul.f32 %v171, 0.29552022
      %v174 = vsub.f32 %v172, %v173
      %v175 = vsel %vm161, %v174, %v151
      %v176 = vmul.f32 %v175, 30.0
      %177 = vst [vmem:[#allocation6] sm:$0xff] %v176
    $region37: #{tpu_custom_call.1} parent=1 // pred_fallthru
      _
    // Predicated region
    $region38: #{tpu_custom_call.1} parent=1 // pred_check
      _
    $region39: #{tpu_custom_call.1} parent=1 // pred_check_branch
      %179 = sbr.rel (0) target = $region41
    $region40: #{tpu_custom_call.1} parent=1 // pred_region
      %s181 = ssub.s32 128, 128
      %182 = vsyncadd [#allocation5], %s181
      %s184 = sshll.u32 [#allocation6], 4
      %s185 = int_to_ptr.vmem [resolvable:$true] %s184
      %187 = dma.vmem_to_hbm [thread:$0]  %s185, 128, %s6, [#allocation5]
    $region41: #{tpu_custom_call.1} parent=1 // pred_fallthru
      _
    // Predicated region
    $region42: #{tpu_custom_call.1} parent=1 // pred_check
      _
    $region43: #{tpu_custom_call.1} parent=1 // pred_check_branch
      %189 = sbr.rel (0) target = $region45
    $region44: #{tpu_custom_call.1} parent=1 // pred_region
      %190 = dma.done [#allocation5], 128
    $region45: #{tpu_custom_call.1} parent=1 // pred_fallthru
      _
    %191 = vsyncpa [#allocation4], 1
    %192 = vsyncpa [#allocation5], 1

</llo_original>
